<compile_context>
chip_gen: v7x
topology: tpu7x:2x2x1
jax: 0.10.0
libtpu: 0.0.40
codegen_flags: <defaults>
</compile_context>

<pallas_src>
import jax
import jax.numpy as jnp
from jax.experimental import pallas as pl
from jax.experimental.pallas import tpu as pltpu


def _round_up(x, m):
    return ((x + m - 1) // m) * m


def _pick_tile(dim_padded, desired, align):
    """Largest multiple of `align` that divides `dim_padded` and is <= desired."""
    t = min(desired, dim_padded)
    t = max((t // align) * align, align)
    while dim_padded % t != 0:
        t -= align
    return t


def _nonlinear_kernel(x_ref, w_ref, b_ref, o_ref):
    # x_ref: (tm, tk) bf16   -- batch rows x K slice
    # w_ref: (tk, tn) bf16   -- pre-transposed W^T tile, K on sublanes
    # b_ref: (1, tn)  f32
    # o_ref: (tm, tn) f32    -- resident across the K grid axis; doubles as the accumulator
    k = pl.program_id(2)

    @pl.when(k == 0)
    def _():
        o_ref[...] = jnp.zeros_like(o_ref)

    o_ref[...] += jnp.dot(x_ref[...], w_ref[...],
                          preferred_element_type=jnp.float32)

    @pl.when(k == pl.num_programs(2) - 1)
    def _():
        # Bias add on the VPU + tanh on the EUP: free filler under MXU/DMA.
        o_ref[...] = jnp.tanh(o_ref[...] + b_ref[...])


def prepare_nonlinear_params(weight, bias=None, *, compute_dtype=jnp.bfloat16):
    """One-time parameter prep (call once at module init, NOT per forward).

    weight: (OUT, IN) f32 (PyTorch nn.Linear layout)
    bias:   (OUT,) f32 or None
    Returns (w_t, b, out_features):
      w_t: (IN_p, OUT_p) bf16  -- transposed + zero-padded to 128 multiples
      b:   (1, OUT_p)   f32    -- zero-padded bias row
    """
    OUT, IN = weight.shape
    IN_p, OUT_p = _round_up(IN, 128), _round_up(OUT, 128)

    w_t = weight.T.astype(compute_dtype)                      # (IN, OUT)
    if (IN_p, OUT_p) != (IN, OUT):
        w_t = jnp.pad(w_t, ((0, IN_p - IN), (0, OUT_p - OUT)))

    b = jnp.zeros((OUT,), jnp.float32) if bias is None else bias.astype(jnp.float32)
    if OUT_p != OUT:
        b = jnp.pad(b, (0, OUT_p - OUT))
    return w_t, b.reshape(1, OUT_p), OUT


def nonlinear_forward(x, w_t, b, out_features, *, tm=256, tn=1024, tk=1024):
    """tanh(x @ W.T + b) using the pre-prepared (w_t, b) from prepare_nonlinear_params."""
    B, IN = x.shape
    IN_p, OUT_p = w_t.shape
    assert IN <= IN_p, "x feature dim does not match prepared weight"

    # Pad x only to dtype alignment (16 sublanes for bf16, 128 lanes); the
    # zero-padded K columns match the zero-padded weight rows, contributing 0.
    B_p = _round_up(B, 16)
    x_p = x.astype(w_t.dtype)
    if (B_p, IN_p) != (B, IN):
        x_p = jnp.pad(x_p, ((0, B_p - B), (0, IN_p - IN)))

    # Tiles must divide the padded dims exactly (no array growth to tile multiples).
    tm = _pick_tile(B_p, tm, 16)
    tn = _pick_tile(OUT_p, tn, 128)
    tk = _pick_tile(IN_p, tk, 128)

    gm, gn, gk = B_p // tm, OUT_p // tn, IN_p // tk
    # v7x megacore balance: if M is a single tile, keep the parallel extent even.
    if gm == 1 and gn % 2 == 1 and tn % 256 == 0:
        tn //= 2
        gn *= 2
    grid = (gm, gn, gk)

    cost = pl.CostEstimate(
        flops=2 * B_p * IN_p * OUT_p,
        transcendentals=B_p * OUT_p,                       # tanh
        bytes_accessed=(2 * x_p.size + 2 * w_t.size        # bf16 inputs
                        + 4 * b.size + 4 * B_p * OUT_p),   # f32 bias + output
    )

    # Double-buffered bf16 input tiles + f32 output tile + slack; keep at least
    # 32 MiB (raises v5e's 16 MiB scoped default) but never above 56 MiB
    # (inside v7x's 64 MiB-per-TC physical VMEM).
    vmem_bytes = 2 * (tm * tk * 2 + tk * tn * 2 + tn * 4 + tm * tn * 4) + (2 << 20)
    vmem_limit = int(min(max(vmem_bytes, 32 << 20), 56 << 20))

    out_p = pl.pallas_call(
        _nonlinear_kernel,
        out_shape=jax.ShapeDtypeStruct((B_p, OUT_p), jnp.float32),
        grid_spec=pltpu.PrefetchScalarGridSpec(
            num_scalar_prefetch=0,
            grid=grid,
            in_specs=[
                pl.BlockSpec((tm, tk), lambda i, j, k: (i, k)),   # x tile
                pl.BlockSpec((tk, tn), lambda i, j, k: (k, j)),   # W^T tile
                pl.BlockSpec((1, tn), lambda i, j, k: (0, j)),    # bias tile
            ],
            out_specs=pl.BlockSpec((tm, tn), lambda i, j, k: (i, j)),
        ),
        compiler_params=pltpu.CompilerParams(
            dimension_semantics=("parallel", "parallel", "arbitrary"),
            vmem_limit_bytes=vmem_limit,
        ),
        cost_estimate=cost,
    )(x_p, w_t, b)

    if (B_p, OUT_p) != (B, out_features):
        out_p = out_p[:B, :out_features]
    return out_p


if __name__ == "__main__":
    # Small shapes consistent with the module: batch=8, input_size=32, output_size=16
    B, IN, OUT = 8, 32, 16

    key = jax.random.PRNGKey(0)
    k_x, k_w, k_b = jax.random.split(key, 3)

    x = jax.random.normal(k_x, (B, IN), dtype=jnp.float32)
    bound = 1.0 / float(jnp.sqrt(IN))
    weight = jax.random.uniform(k_w, (OUT, IN), minval=-bound, maxval=bound,
                                dtype=jnp.float32)
    bias = jax.random.uniform(k_b, (OUT,), minval=-bound, maxval=bound,
                              dtype=jnp.float32)

    # One-time prep (module init), outside the per-call hot path.
    w_t, b_row, out_features = prepare_nonlinear_params(weight, bias)

    out = nonlinear_forward(x, w_t, b_row, out_features)
    out = jax.block_until_ready(out)

    # Reference (same math as torch): tanh(x @ W.T + b), full f32.
    ref = jnp.tanh(x @ weight.T + bias)
    assert out.shape == (B, OUT)
    assert jnp.allclose(out, ref, atol=2e-2, rtol=2e-2), (
        float(jnp.max(jnp.abs(out - ref))))

    print("KERNEL_OK")
</pallas_src>

<mosaic_0001>
module attributes {stable_mosaic.version = 11 : i64} {
  func.func @_nonlinear_kernel(%arg0: i32, %arg1: i32, %arg2: i32, %arg3: memref<16x128xbf16, #tpu.memory_space<vmem>>, %arg4: memref<128x128xbf16, #tpu.memory_space<vmem>>, %arg5: memref<1x128xf32, #tpu.memory_space<vmem>>, %arg6: memref<16x128xf32, #tpu.memory_space<vmem>>) attributes {dimension_semantics = [#tpu.dimension_semantics<parallel>, #tpu.dimension_semantics<parallel>, #tpu.dimension_semantics<arbitrary>], iteration_bounds = array<i64: 1, 1, 1>, scalar_prefetch = 0 : i64, scratch_operands = 0 : i64, tpu.core_type = #tpu.core_type<tc>, window_params = [{transform_indices = @transform_0, window_bounds = array<i64: 16, 128>}, {transform_indices = @transform_1, window_bounds = array<i64: 128, 128>}, {transform_indices = @transform_2, window_bounds = array<i64: 1, 128>}, {transform_indices = @transform_3, window_bounds = array<i64: 16, 128>}]} {
    %c0_i32 = arith.constant 0 : i32
    %0 = arith.cmpi eq, %arg2, %c0_i32 : i32
    %1 = arith.extui %0 : i1 to i32
    %c0_i32_0 = arith.constant 0 : i32
    %2 = arith.cmpi ne, %1, %c0_i32_0 : i32
    scf.if %2 {
      %cst_10 = arith.constant 0.000000e+00 : f32
      %12 = vector.broadcast %cst_10 : f32 to vector<16x128xf32>
      %c0_11 = arith.constant 0 : index
      %c0_12 = arith.constant 0 : index
      %13 = vector.load %arg6[%c0_11, %c0_12] : memref<16x128xf32, #tpu.memory_space<vmem>>, vector<16x128xf32>
      tpu.vector_store %arg6[%c0_11, %c0_12], %12 {strides = array<i32>} : memref<16x128xf32, #tpu.memory_space<vmem>>, vector<16x128xf32>,
    } else {
    }
    %c0 = arith.constant 0 : index
    %c0_1 = arith.constant 0 : index
    %3 = vector.load %arg6[%c0, %c0_1] : memref<16x128xf32, #tpu.memory_space<vmem>>, vector<16x128xf32>
    %c0_2 = arith.constant 0 : index
    %c0_3 = arith.constant 0 : index
    %4 = vector.load %arg3[%c0_2, %c0_3] : memref<16x128xbf16, #tpu.memory_space<vmem>>, vector<16x128xbf16>
    %c0_4 = arith.constant 0 : index
    %c0_5 = arith.constant 0 : index
    %5 = vector.load %arg4[%c0_4, %c0_5] : memref<128x128xbf16, #tpu.memory_space<vmem>>, vector<128x128xbf16>
    %cst = arith.constant dense<0.000000e+00> : vector<16x128xf32>
    %6 = tpu.matmul %4, %5, %cst {dimension_numbers = #tpu.dot_dimension_numbers<[1], [0], [0], [1], [0, 0, 1, 1], [], []>} : vector<16x128xbf16>, vector<128x128xbf16>, vector<16x128xf32> -> vector<16x128xf32>
    %7 = arith.addf %3, %6 : vector<16x128xf32>
    %c0_6 = arith.constant 0 : index
    %c0_7 = arith.constant 0 : index
    %8 = vector.load %arg6[%c0_6, %c0_7] : memref<16x128xf32, #tpu.memory_space<vmem>>, vector<16x128xf32>
    tpu.vector_store %arg6[%c0_6, %c0_7], %7 {strides = array<i32>} : memref<16x128xf32, #tpu.memory_space<vmem>>, vector<16x128xf32>,
    %c0_i32_8 = arith.constant 0 : i32
    %9 = arith.cmpi eq, %arg2, %c0_i32_8 : i32
    %10 = arith.extui %9 : i1 to i32
    %c0_i32_9 = arith.constant 0 : i32
    %11 = arith.cmpi ne, %10, %c0_i32_9 : i32
    scf.if %11 {
      %c0_10 = arith.constant 0 : index
      %c0_11 = arith.constant 0 : index
      %12 = vector.load %arg6[%c0_10, %c0_11] : memref<16x128xf32, #tpu.memory_space<vmem>>, vector<16x128xf32>
      %c0_12 = arith.constant 0 : index
      %c0_13 = arith.constant 0 : index
      %13 = vector.load %arg5[%c0_12, %c0_13] : memref<1x128xf32, #tpu.memory_space<vmem>>, vector<1x128xf32>
      %14 = vector.broadcast %13 : vector<1x128xf32> to vector<16x128xf32>
      %15 = arith.addf %12, %14 : vector<16x128xf32>
      %16 = math.tanh %15 : vector<16x128xf32>
      %c0_14 = arith.constant 0 : index
      %c0_15 = arith.constant 0 : index
      %17 = vector.load %arg6[%c0_14, %c0_15] : memref<16x128xf32, #tpu.memory_space<vmem>>, vector<16x128xf32>
      tpu.vector_store %arg6[%c0_14, %c0_15], %16 {strides = array<i32>} : memref<16x128xf32, #tpu.memory_space<vmem>>, vector<16x128xf32>,
    } else {
    }
    return
  }
  func.func @transform_0(%arg0: i32, %arg1: i32, %arg2: i32) -> (i32, i32) {
    %c0_i32 = arith.constant 0 : i32
    return %arg0, %arg2 : i32, i32
  }
  func.func @transform_1(%arg0: i32, %arg1: i32, %arg2: i32) -> (i32, i32) {
    %c0_i32 = arith.constant 0 : i32
    return %arg2, %arg1 : i32, i32
  }
  func.func @transform_2(%arg0: i32, %arg1: i32, %arg2: i32) -> (i32, i32) {
    %c0_i32 = arith.constant 0 : i32
    %c0_i32_0 = arith.constant 0 : i32
    return %c0_i32, %arg1 : i32, i32
  }
  func.func @transform_3(%arg0: i32, %arg1: i32, %arg2: i32) -> (i32, i32) {
    %c0_i32 = arith.constant 0 : i32
    return %arg0, %arg1 : i32, i32
  }
}

</mosaic_0001>

<llo_original>
// kernel: tpu_custom_call.1
$region0: #{tpu_custom_call.1}
  #allocation0 [shape = 'u32[]', space=smem, size = 0x4, offset = 0x4, fixed_abs, tag = 'smem constant byte address 0x4 - core index']
  #allocation1 [shape = 'u32[144,128]{1,0:T(1,128)}', space=vmem, size = 0x12000, scoped, tag = 'internal scratch']
  %s0 = inlined_call_operand.hbm [shape: bf16[16,128], index: 0, kind: input, shape index: {}]
  %s1 = inlined_call_operand.hbm [shape: bf16[128,128], index: 1, kind: input, shape index: {}]
  %s2 = inlined_call_operand.vmem [shape: f32[1,128], index: 2, kind: input, shape index: {}]
  %s3 = inlined_call_operand.hbm [shape: f32[16,128], index: 3, kind: output, shape index: {}]
  %s4 = sld [smem:[#allocation0]]
  $region38: #{tpu_custom_call.1} parent=0
    _
  %s6 = ssub.s32 1, %s4
  %s7 = scalar_select 0, %s6, %s4
  $region1: #{tpu_custom_call.1} parent=0
    #allocation2 [shape = 'u8[4096]{0}', space=vmem, size = 0x1000, scoped, tag = 'input window, operand 0, single buffered']
    #allocation3 [shape = 's32[1]{0}', space=sflag, size = 0x4, scoped, tag = 'scoped memory for tpu_custom_call.1']
    #allocation4 [shape = 's32[1]{0}', space=sflag, size = 0x4, scoped, tag = 'scoped memory for tpu_custom_call.1']
    #allocation5 [shape = 'u8[32768]{0}', space=vmem, size = 0x8000, scoped, tag = 'input window, operand 1, single buffered']
    #allocation6 [shape = 's32[1]{0}', space=sflag, size = 0x4, scoped, tag = 'scoped memory for tpu_custom_call.1']
    #allocation7 [shape = 'u8[8192]{0}', space=vmem, size = 0x2000, scoped, tag = 'output window, operand 0, single buffered']
    %8 = vsyncpa [#allocation3], 0
    %9 = vsyncpa [#allocation6], 0
    %10 = vsyncpa [#allocation4], 0
    // Predicated region
    $region2: #{tpu_custom_call.1} parent=1 // pred_check
      _
    $region3: #{tpu_custom_call.1} parent=1 // pred_check_branch
      %12 = sbr.rel (0) target = $region5
    $region4: #{tpu_custom_call.1} parent=1 // pred_region
      %s14 = ssub.s32 128, 128
      %15 = vsyncadd [#allocation3], %s14
      %s16 = sshll.u32 [#allocation2], 4
      %s17 = int_to_ptr.vmem [resolvable:$true] %s16
      %22 = dma.hbm_to_vmem [thread:$0]  %s0, 128, %s17, [#allocation3], 64, 64, 4
    $region5: #{tpu_custom_call.1} parent=1 // pred_fallthru
      _
    // Predicated region
    $region6: #{tpu_custom_call.1} parent=1 // pred_check
      _
    $region7: #{tpu_custom_call.1} parent=1 // pred_check_branch
      %24 = sbr.rel (0) target = $region9
    $region8: #{tpu_custom_call.1} parent=1 // pred_region
      %s26 = ssub.s32 1024, 1024
      %27 = vsyncadd [#allocation6], %s26
      %s28 = sshll.u32 [#allocation5], 4
      %s29 = int_to_ptr.vmem [resolvable:$true] %s28
      %34 = dma.hbm_to_vmem [thread:$0]  %s1, 1024, %s29, [#allocation6], 64, 64, 4
    $region9: #{tpu_custom_call.1} parent=1 // pred_fallthru
      _
    // Predicated region
    $region10: #{tpu_custom_call.1} parent=1 // pred_check
      _
    $region11: #{tpu_custom_call.1} parent=1 // pred_check_branch
      %36 = sbr.rel (0) target = $region13
    $region12: #{tpu_custom_call.1} parent=1 // pred_region
      _
    $region13: #{tpu_custom_call.1} parent=1 // pred_fallthru
      _
    // Predicated region
    $region14: #{tpu_custom_call.1} parent=1 // pred_check
      _
    $region15: #{tpu_custom_call.1} parent=1 // pred_check_branch
      %38 = sbr.rel (0) target = $region17
    $region16: #{tpu_custom_call.1} parent=1 // pred_region
      %39 = dma.done [#allocation3], 128
    $region17: #{tpu_custom_call.1} parent=1 // pred_fallthru
      _
    // Predicated region
    $region18: #{tpu_custom_call.1} parent=1 // pred_check
      _
    $region19: #{tpu_custom_call.1} parent=1 // pred_check_branch
      %41 = sbr.rel (0) target = $region21
    $region20: #{tpu_custom_call.1} parent=1 // pred_region
      %42 = dma.done [#allocation6], 1024
    $region21: #{tpu_custom_call.1} parent=1 // pred_fallthru
      _
    %p44 = scmp.eq.s32.totalorder 0, 0
    // Predicated region
    $region22: #{tpu_custom_call.1} parent=1 // pred_check
      %p45 = pneg %p44
    $region23: #{tpu_custom_call.1} parent=1 // pred_check_branch
      %47 = sbr.rel (%p45) target = $region25
    $region24: #{tpu_custom_call.1} parent=1 // pred_region
      %48 = vst [vmem:[#allocation7] sm:$0xff] 0.0
      %49 = vst [vmem:[#allocation7 + $0x8] sm:$0xff] 0.0
    $region25: #{tpu_custom_call.1} parent=1 // pred_fallthru
      _
    %v50 = vld [vmem:[#allocation7] sm:$0xff]
    %v51 = vld [vmem:[#allocation7 + $0x8] sm:$0xff]
    %v52 = vld [vmem:[#allocation2] sm:$0xf]
    %v53 = vld [vmem:[#allocation2 + $0x4] sm:$0xf]
    %v54 = vld [vmem:[#allocation5] sm:$0xf]
    %v55 = vld [vmem:[#allocation5 + $0x4] sm:$0xf]
    %v56 = vld [vmem:[#allocation5 + $0x8] sm:$0xf]
    %v57 = vld [vmem:[#allocation5 + $0xc] sm:$0xf]
    %v58 = vld [vmem:[#allocation5 + $0x10] sm:$0xf]
    %v59 = vld [vmem:[#allocation5 + $0x14] sm:$0xf]
    %v60 = vld [vmem:[#allocation5 + $0x18] sm:$0xf]
    %v61 = vld [vmem:[#allocation5 + $0x1c] sm:$0xf]
    %v62 = vld [vmem:[#allocation5 + $0x20] sm:$0xf]
    %v63 = vld [vmem:[#allocation5 + $0x24] sm:$0xf]
    %v64 = vld [vmem:[#allocation5 + $0x28] sm:$0xf]
    %v65 = vld [vmem:[#allocation5 + $0x2c] sm:$0xf]
    %v66 = vld [vmem:[#allocation5 + $0x30] sm:$0xf]
    %v67 = vld [vmem:[#allocation5 + $0x34] sm:$0xf]
    %v68 = vld [vmem:[#allocation5 + $0x38] sm:$0xf]
    %v69 = vld [vmem:[#allocation5 + $0x3c] sm:$0xf]
    %v72 = vunpack.c.l.b16 %v52
    %v73 = vunpack.c.l.b16 %v53
    %v74 = vpack.c.b16 %v73, %v72
    %v92 = vunpack.c.l.b16 %v54
    %v93 = vunpack.c.l.b16 %v55
    %v94 = vunpack.c.l.b16 %v56
    %v95 = vunpack.c.l.b16 %v57
    %v96 = vunpack.c.l.b16 %v58
    %v97 = vunpack.c.l.b16 %v59
    %v98 = vunpack.c.l.b16 %v60
    %v99 = vunpack.c.l.b16 %v61
    %v100 = vunpack.c.l.b16 %v62
    %v101 = vunpack.c.l.b16 %v63
    %v102 = vunpack.c.l.b16 %v64
    %v103 = vunpack.c.l.b16 %v65
    %v104 = vunpack.c.l.b16 %v66
    %v105 = vunpack.c.l.b16 %v67
    %v106 = vunpack.c.l.b16 %v68
    %v107 = vunpack.c.l.b16 %v69
    %v108 = vpack.c.b16 %v93, %v92
    %v109 = vpack.c.b16 %v95, %v94
    %v110 = vpack.c.b16 %v97, %v96
    %v111 = vpack.c.b16 %v99, %v98
    %v112 = vpack.c.b16 %v101, %v100
    %v113 = vpack.c.b16 %v103, %v102
    %v114 = vpack.c.b16 %v105, %v104
    %v115 = vpack.c.b16 %v107, %v106
    %124 = vmatprep.subr.bf16.mxu0 0
    %125 = vmatpush1.bf16.msra.mxu0 %v108
    %126 = vmatprep.subr.bf16.mxu0 0
    %127 = vmatpush1.bf16.msra.mxu0 %v109
    %128 = vmatprep.subr.bf16.mxu0 0
    %129 = vmatpush1.bf16.msra.mxu0 %v110
    %130 = vmatprep.subr.bf16.mxu0 0
    %131 = vmatpush1.bf16.msra.mxu0 %v111
    %132 = vmatprep.subr.bf16.mxu0 0
    %133 = vmatpush1.bf16.msra.mxu0 %v112
    %134 = vmatprep.subr.bf16.mxu0 0
    %135 = vmatpush1.bf16.msra.mxu0 %v113
    %136 = vmatprep.subr.bf16.mxu0 0
    %137 = vmatpush1.bf16.msra.mxu0 %v114
    %138 = vmatprep.subr.bf16.mxu0 0
    %139 = vmatpush1.bf16.msra.mxu0 %v115
    %140 = vmatprep.subr.bf16.mxu0 0
    %141 = vmatpush1.bf16.msra.mxu0 0
    %142 = vmatprep.subr.bf16.mxu0 0
    %143 = vmatpush1.bf16.msra.mxu0 0
    %144 = vmatprep.subr.bf16.mxu0 0
    %145 = vmatpush1.bf16.msra.mxu0 0
    %146 = vmatprep.subr.bf16.mxu0 0
    %147 = vmatpush1.bf16.msra.mxu0 0
    %148 = vmatprep.subr.bf16.mxu0 0
    %149 = vmatpush1.bf16.msra.mxu0 0
    %150 = vmatprep.subr.bf16.mxu0 0
    %151 = vmatpush1.bf16.msra.mxu0 0
    %152 = vmatprep.subr.bf16.mxu0 0
    %153 = vmatpush1.bf16.msra.mxu0 0
    %154 = vmatprep.subr.bf16.mxu0 0
    %155 = vmatpush1.bf16.msra.mxu0 0
    %156 = vmatprep.mubr.bf16.mxu0 0
    %157 = vmatmul.mubr.bf16.gmra.mrb[0].mxu0 %v74
    %v158 = vpop.f32.mrb[0].mxu0
    %v159 = vadd.f32 0.0, %v158
    %v160 = vpop.f32.mrb[0].mxu0
    %v161 = vpop.f32.mrb[0].mxu0
    %v162 = vadd.f32 0.0, %v161
    %v163 = vpop.f32.mrb[0].mxu0
    %164 = vdwg.mxu0
    %v165 = vadd.f32 %v50, %v159
    %v166 = vadd.f32 %v51, %v162
    %167 = vst [vmem:[#allocation7] sm:$0xff] %v165
    %168 = vst [vmem:[#allocation7 + $0x8] sm:$0xff] %v166
    // Predicated region
    $region26: #{tpu_custom_call.1} parent=1 // pred_check
      %p169 = pneg %p44
    $region27: #{tpu_custom_call.1} parent=1 // pred_check_branch
      %171 = sbr.rel (%p169) target = $region29
    $region28: #{tpu_custom_call.1} parent=1 // pred_region
      %v172 = vld [vmem:[#allocation7] sm:$0xff]
      %v173 = vld [vmem:[#allocation7 + $0x8] sm:$0xff]
      %v174 = vld [vmem:[%s2] sm:$0x1]
      %v176 = vlaneseq
      %v177 = vshrl.u32 %v176, 7
      %v178 = vsub.s32 0, %v177
      %v179 = vrot.slane %v174, %v178
      %v181 = vadd.f32 %v172, %v179
      %v182 = vadd.f32 %v173, %v179
      %v183 = vtanh.pop %v181
      %v184 = vtanh.pop %v182
      %185 = vst [vmem:[#allocation7] sm:$0xff] %v183
      %186 = vst [vmem:[#allocation7 + $0x8] sm:$0xff] %v184
    $region29: #{tpu_custom_call.1} parent=1 // pred_fallthru
      _
    // Predicated region
    $region30: #{tpu_custom_call.1} parent=1 // pred_check
      _
    $region31: #{tpu_custom_call.1} parent=1 // pred_check_branch
      %188 = sbr.rel (0) target = $region33
    $region32: #{tpu_custom_call.1} parent=1 // pred_region
      %s190 = ssub.s32 256, 256
      %191 = vsyncadd [#allocation4], %s190
      %s192 = sshll.u32 [#allocation7], 4
      %s193 = int_to_ptr.vmem [resolvable:$true] %s192
      %198 = dma.vmem_to_hbm [thread:$0]  %s193, 256, %s3, [#allocation4], 128, 128, 8
    $region33: #{tpu_custom_call.1} parent=1 // pred_fallthru
      _
    // Predicated region
    $region34: #{tpu_custom_call.1} parent=1 // pred_check
      _
    $region35: #{tpu_custom_call.1} parent=1 // pred_check_branch
      %200 = sbr.rel (0) target = $region37
    $region36: #{tpu_custom_call.1} parent=1 // pred_region
      %201 = dma.done [#allocation4], 256
    $region37: #{tpu_custom_call.1} parent=1 // pred_fallthru
      _
    %202 = vsyncpa [#allocation3], 1
    %203 = vsyncpa [#allocation6], 1
    %204 = vsyncpa [#allocation4], 1

</llo_original>
